<compile_context>
chip_gen: v6e
topology: v6e:2x2x1
jax: 0.10.0
libtpu: 0.0.40
codegen_flags: <defaults>
</compile_context>

<pallas_src>
import functools

import jax
import jax.numpy as jnp
import numpy as np
from jax.experimental import pallas as pl
from jax.experimental.pallas import tpu as pltpu


def _round_up(a: int, m: int) -> int:
    return -(-a // m) * m


def _focus_kernel(y_ref, w_ref, bias_ref, o_ref):
    # y_ref:    (C4P, TP)   space-to-depth channels on sublanes, pixels on lanes
    # w_ref:    (OCP, C4P)  1x1 conv weight with BN scale folded in (native dtype)
    # bias_ref: (OCP, 1)    folded BN bias: beta - running_mean * gamma / sqrt(var + eps)
    # o_ref:    (OCP, TP)
    # 1x1 conv == channel matmul -> MXU, f32 accumulation.
    acc = jnp.dot(w_ref[...], y_ref[...], preferred_element_type=jnp.float32)
    z = acc + bias_ref[...]
    # SiLU: z * sigmoid(z); the reciprocal goes to the approx EUP path (free slot).
    sig = pl.reciprocal(1.0 + jnp.exp(-z), approx=True)
    o_ref[...] = (z * sig).astype(o_ref.dtype)


def focus_forward(x, w2d, gamma, beta, mean, var, *, eps=1e-5, tile_p=None,
                  allow_input_fusion=True):
    """x: (B, C, H, W); w2d: (OC, 4C) 1x1 conv weight; BN params: (OC,).

    Returns (B, OC, H//2, W//2) in x.dtype (eval-mode BatchNorm, SiLU activation).
    """
    b, c, h, w = x.shape
    oc, c4 = w2d.shape
    assert c4 == 4 * c, f"conv in_channels must be 4*C ({4 * c}), got {c4}"
    assert h % 2 == 0 and w % 2 == 0
    hp, wp = h // 2, w // 2
    p = hp * wp

    itemsize = jnp.dtype(x.dtype).itemsize
    sub = {4: 8, 2: 16, 1: 32}.get(itemsize, 8)   # sublane multiple for this dtype
    c4p = _round_up(c4, sub)                      # pad contraction channels
    ocp = _round_up(oc, sub)                      # pad output channels -> unmasked stores

    # ---- pixel-tile selection: large lane-dense tiles, bounded VMEM, >=2-4 grid steps ----
    p128 = _round_up(p, 128)
    if tile_p is None:
        per_lane = 2 * (c4p + ocp) * itemsize      # double-buffered in+out bytes per lane
        vmem_cap = max(128, ((6 << 20) // per_lane) // 128 * 128)
        want_tiles = 4 if b == 1 else 2            # pipelining + 2-TC sharding on v7x
        par_cap = max(128, (p128 // want_tiles) // 128 * 128)
        tile_p = int(min(8192, p128, vmem_cap, par_cap))
    assert tile_p % 128 == 0, "pixel tile must keep lane-dense (multiple of 128) stores"
    p_pad = _round_up(p, tile_p)

    # ---- space-to-depth (layout plumbing; candidate for input fusion under jit) ----
    y = jnp.concatenate(
        (x[..., ::2, ::2], x[..., 1::2, ::2], x[..., ::2, 1::2], x[..., 1::2, 1::2]),
        axis=1).reshape(b, c4, p)
    y = jnp.pad(y, ((0, 0), (0, c4p - c4), (0, p_pad - p)))          # (B, C4P, P_pad)

    # ---- fold eval-mode BatchNorm into the conv weight + a per-channel bias ----
    s = gamma.astype(jnp.float32) * jax.lax.rsqrt(var.astype(jnp.float32) + eps)
    w_fused = (w2d.astype(jnp.float32) * s[:, None]).astype(x.dtype)  # (OC, 4C)
    w_fused = jnp.pad(w_fused, ((0, ocp - oc), (0, c4p - c4)))        # (OCP, C4P)
    bias = jnp.pad(beta.astype(jnp.float32) - mean.astype(jnp.float32) * s,
                   (0, ocp - oc)).reshape(ocp, 1)                     # (OCP, 1), f32

    grid = (b, p_pad // tile_p)
    cp_kwargs = dict(
        dimension_semantics=("parallel", "parallel"),
        vmem_limit_bytes=32 * 1024 * 1024,
    )
    if allow_input_fusion:
        # Let XLA fuse the slice/concat/pad producer of `y` into the kernel's input DMA
        # (avoids one full activation write + read in HBM when this function is jitted).
        cp_kwargs["allow_input_fusion"] = [True, False, False]

    out = pl.pallas_call(
        _focus_kernel,
        out_shape=jax.ShapeDtypeStruct((b, ocp, p_pad), x.dtype),
        grid=grid,
        in_specs=[
            pl.BlockSpec((None, c4p, tile_p), lambda bi, j: (bi, 0, j)),
            pl.BlockSpec((ocp, c4p), lambda bi, j: (0, 0)),
            pl.BlockSpec((ocp, 1), lambda bi, j: (0, 0)),
        ],
        out_specs=pl.BlockSpec((None, ocp, tile_p), lambda bi, j: (bi, 0, j)),
        compiler_params=pltpu.CompilerParams(**cp_kwargs),
    )(y, w_fused, bias)

    return out[:, :oc, :p].reshape(b, oc, hp, wp)


def focus_reference(x, w2d, gamma, beta, mean, var, eps=1e-5):
    """Pure-JAX reference mirroring the PyTorch forward (eval-mode BatchNorm)."""
    y = jnp.concatenate((x[..., ::2, ::2], x[..., 1::2, ::2],
                         x[..., ::2, 1::2], x[..., 1::2, 1::2]), axis=1)
    z = jnp.einsum("oc,bchw->bohw", w2d, y)                           # 1x1 conv, no bias
    s = gamma * jax.lax.rsqrt(var + eps)
    z = z * s[None, :, None, None] + (beta - mean * s)[None, :, None, None]
    return z * jax.nn.sigmoid(z)                                      # SiLU


if __name__ == "__main__":
    key = jax.random.PRNGKey(0)
    b, c_in, h, w = 2, 4, 16, 16
    ch_out = 16

    k1, k2, k3, k4, k5, k6 = jax.random.split(key, 6)
    x = jax.random.normal(k1, (b, c_in, h, w), dtype=jnp.float32)
    w2d = 0.2 * jax.random.normal(k2, (ch_out, 4 * c_in), dtype=jnp.float32)
    gamma = 1.0 + 0.1 * jax.random.normal(k3, (ch_out,), dtype=jnp.float32)
    beta = 0.1 * jax.random.normal(k4, (ch_out,), dtype=jnp.float32)
    mean = 0.1 * jax.random.normal(k5, (ch_out,), dtype=jnp.float32)
    var = 0.5 + jnp.abs(jax.random.normal(k6, (ch_out,), dtype=jnp.float32))

    def run(allow_fusion):
        @jax.jit
        def f(x, w2d, gamma, beta, mean, var):
            return focus_forward(x, w2d, gamma, beta, mean, var,
                                 allow_input_fusion=allow_fusion)
        return jax.block_until_ready(f(x, w2d, gamma, beta, mean, var))

    try:
        out = run(True)
    except Exception:
        # Input fusion is a perf-only feature; fall back if the backend rejects it.
        out = run(False)

    ref = focus_reference(x, w2d, gamma, beta, mean, var)
    assert out.shape == (b, ch_out, h // 2, w // 2)
    assert out.dtype == x.dtype
    # approx=True sigmoid reciprocal -> ~1e-3-level relative error vs exact reference.
    np.testing.assert_allclose(np.asarray(out), np.asarray(ref), rtol=5e-3, atol=5e-3)

    # Native-dtype (bf16) smoke test: bf16 in/out, f32 accumulation inside the kernel.
    x_bf = x.astype(jnp.bfloat16)
    out_bf = jax.block_until_ready(
        jax.jit(lambda *a: focus_forward(*a, allow_input_fusion=False))(
            x_bf, w2d, gamma, beta, mean, var))
    assert out_bf.dtype == jnp.bfloat16 and out_bf.shape == out.shape
    ref_bf = focus_reference(x_bf.astype(jnp.float32), w2d, gamma, beta, mean, var)
    np.testing.assert_allclose(np.asarray(out_bf.astype(jnp.float32)),
                               np.asarray(ref_bf), rtol=3e-2, atol=3e-2)

    print("KERNEL_OK")
</pallas_src>

<mosaic_0001>
module attributes {stable_mosaic.version = 11 : i64} {
  func.func @_focus_kernel(%arg0: i32, %arg1: i32, %arg2: memref<1x16x128xf32, #tpu.memory_space<vmem>>, %arg3: memref<16x16xf32, #tpu.memory_space<vmem>>, %arg4: memref<16x1xf32, #tpu.memory_space<vmem>>, %arg5: memref<1x16x128xf32, #tpu.memory_space<vmem>>) attributes {dimension_semantics = [#tpu.dimension_semantics<parallel>, #tpu.dimension_semantics<parallel>], iteration_bounds = array<i64: 2, 1>, scalar_prefetch = 0 : i64, scratch_operands = 0 : i64, tpu.core_type = #tpu.core_type<tc>, window_params = [{transform_indices = @transform_0, window_bounds = array<i64: 1, 16, 128>}, {pipeline_mode = #tpu.pipeline_mode<synchronous>, transform_indices = @transform_1, window_bounds = array<i64: 16, 16>}, {pipeline_mode = #tpu.pipeline_mode<synchronous>, transform_indices = @transform_2, window_bounds = array<i64: 16, 1>}, {transform_indices = @transform_3, window_bounds = array<i64: 1, 16, 128>}]} {
    %c0 = arith.constant 0 : index
    %c0_0 = arith.constant 0 : index
    %0 = vector.load %arg3[%c0, %c0_0] : memref<16x16xf32, #tpu.memory_space<vmem>>, vector<16x16xf32>
    %c0_1 = arith.constant 0 : index
    %c0_2 = arith.constant 0 : index
    %c0_3 = arith.constant 0 : index
    %1 = vector.load %arg2[%c0_1, %c0_2, %c0_3] : memref<1x16x128xf32, #tpu.memory_space<vmem>>, vector<1x16x128xf32>
    %2 = vector.shape_cast %1 : vector<1x16x128xf32> to vector<16x128xf32>
    %cst = arith.constant dense<0.000000e+00> : vector<16x128xf32>
    %3 = tpu.matmul %0, %2, %cst {dimension_numbers = #tpu.dot_dimension_numbers<[1], [0], [0], [1], [0, 0, 1, 1], [], []>} : vector<16x16xf32>, vector<16x128xf32>, vector<16x128xf32> -> vector<16x128xf32>
    %c0_4 = arith.constant 0 : index
    %c0_5 = arith.constant 0 : index
    %4 = vector.load %arg4[%c0_4, %c0_5] : memref<16x1xf32, #tpu.memory_space<vmem>>, vector<16x1xf32>
    %5 = vector.broadcast %4 : vector<16x1xf32> to vector<16x128xf32>
    %6 = arith.addf %3, %5 : vector<16x128xf32>
    %cst_6 = arith.constant 0.000000e+00 : f32
    %7 = vector.broadcast %cst_6 : f32 to vector<16x128xf32>
    %8 = arith.subf %7, %6 : vector<16x128xf32>
    %9 = math.exp %8 : vector<16x128xf32>
    %cst_7 = arith.constant 1.000000e+00 : f32
    %10 = vector.broadcast %cst_7 : f32 to vector<16x128xf32>
    %11 = arith.addf %10, %9 : vector<16x128xf32>
    %12 = tpu.reciprocal %11 {approx = true} : vector<16x128xf32> -> vector<16x128xf32>
    %13 = arith.mulf %6, %12 : vector<16x128xf32>
    %c0_8 = arith.constant 0 : index
    %c0_9 = arith.constant 0 : index
    %c0_10 = arith.constant 0 : index
    %14 = vector.load %arg5[%c0_8, %c0_9, %c0_10] : memref<1x16x128xf32, #tpu.memory_space<vmem>>, vector<1x16x128xf32>
    %15 = vector.shape_cast %14 : vector<1x16x128xf32> to vector<16x128xf32>
    %16 = vector.shape_cast %13 : vector<16x128xf32> to vector<1x16x128xf32>
    tpu.vector_store %arg5[%c0_8, %c0_9, %c0_10], %16 {strides = array<i32>} : memref<1x16x128xf32, #tpu.memory_space<vmem>>, vector<1x16x128xf32>,
    return
  }
  func.func @transform_0(%arg0: i32, %arg1: i32) -> (i32, i32, i32) {
    %c0_i32 = arith.constant 0 : i32
    %c0_i32_0 = arith.constant 0 : i32
    return %arg0, %c0_i32, %arg1 : i32, i32, i32
  }
  func.func @transform_1(%arg0: i32, %arg1: i32) -> (i32, i32) {
    %c0_i32 = arith.constant 0 : i32
    %c0_i32_0 = arith.constant 0 : i32
    %c0_i32_1 = arith.constant 0 : i32
    return %c0_i32, %c0_i32_0 : i32, i32
  }
  func.func @transform_2(%arg0: i32, %arg1: i32) -> (i32, i32) {
    %c0_i32 = arith.constant 0 : i32
    %c0_i32_0 = arith.constant 0 : i32
    %c0_i32_1 = arith.constant 0 : i32
    return %c0_i32, %c0_i32_0 : i32, i32
  }
  func.func @transform_3(%arg0: i32, %arg1: i32) -> (i32, i32, i32) {
    %c0_i32 = arith.constant 0 : i32
    %c0_i32_0 = arith.constant 0 : i32
    return %arg0, %c0_i32, %arg1 : i32, i32, i32
  }
}

module attributes {stable_mosaic.version = 11 : i64} {
  func.func @_focus_kernel(%arg0: i32, %arg1: i32, %arg2: memref<1x16x128xf32, #tpu.memory_space<vmem>>, %arg3: memref<16x16xf32, #tpu.memory_space<vmem>>, %arg4: memref<16x1xf32, #tpu.memory_space<vmem>>, %arg5: memref<1x16x128xf32, #tpu.memory_space<vmem>>) attributes {dimension_semantics = [#tpu.dimension_semantics<parallel>, #tpu.dimension_semantics<parallel>], iteration_bounds = array<i64: 2, 1>, scalar_prefetch = 0 : i64, scratch_operands = 0 : i64, tpu.core_type = #tpu.core_type<tc>, window_params = [{transform_indices = @transform_0, window_bounds = array<i64: 1, 16, 128>}, {pipeline_mode = #tpu.pipeline_mode<synchronous>, transform_indices = @transform_1, window_bounds = array<i64: 16, 16>}, {pipeline_mode = #tpu.pipeline_mode<synchronous>, transform_indices = @transform_2, window_bounds = array<i64: 16, 1>}, {transform_indices = @transform_3, window_bounds = array<i64: 1, 16, 128>}]} {
    %c0 = arith.constant 0 : index
    %c0_0 = arith.constant 0 : index
    %0 = vector.load %arg3[%c0, %c0_0] : memref<16x16xf32, #tpu.memory_space<vmem>>, vector<16x16xf32>
    %c0_1 = arith.constant 0 : index
    %c0_2 = arith.constant 0 : index
    %c0_3 = arith.constant 0 : index
    %1 = vector.load %arg2[%c0_1, %c0_2, %c0_3] : memref<1x16x128xf32, #tpu.memory_space<vmem>>, vector<1x16x128xf32>
    %2 = vector.shape_cast %1 : vector<1x16x128xf32> to vector<16x128xf32>
    %cst = arith.constant dense<0.000000e+00> : vector<16x128xf32>
    %3 = tpu.matmul %0, %2, %cst {dimension_numbers = #tpu.dot_dimension_numbers<[1], [0], [0], [1], [0, 0, 1, 1], [], []>} : vector<16x16xf32>, vector<16x128xf32>, vector<16x128xf32> -> vector<16x128xf32>
    %c0_4 = arith.constant 0 : index
    %c0_5 = arith.constant 0 : index
    %4 = vector.load %arg4[%c0_4, %c0_5] : memref<16x1xf32, #tpu.memory_space<vmem>>, vector<16x1xf32>
    %5 = vector.broadcast %4 : vector<16x1xf32> to vector<16x128xf32>
    %6 = arith.addf %3, %5 : vector<16x128xf32>
    %cst_6 = arith.constant 0.000000e+00 : f32
    %7 = vector.broadcast %cst_6 : f32 to vector<16x128xf32>
    %8 = arith.subf %7, %6 : vector<16x128xf32>
    %9 = math.exp %8 : vector<16x128xf32>
    %cst_7 = arith.constant 1.000000e+00 : f32
    %10 = vector.broadcast %cst_7 : f32 to vector<16x128xf32>
    %11 = arith.addf %10, %9 : vector<16x128xf32>
    %12 = tpu.reciprocal %11 {approx = true} : vector<16x128xf32> -> vector<16x128xf32>
    %13 = arith.mulf %6, %12 : vector<16x128xf32>
    %c0_8 = arith.constant 0 : index
    %c0_9 = arith.constant 0 : index
    %c0_10 = arith.constant 0 : index
    %14 = vector.load %arg5[%c0_8, %c0_9, %c0_10] : memref<1x16x128xf32, #tpu.memory_space<vmem>>, vector<1x16x128xf32>
    %15 = vector.shape_cast %14 : vector<1x16x128xf32> to vector<16x128xf32>
    %16 = vector.shape_cast %13 : vector<16x128xf32> to vector<1x16x128xf32>
    tpu.vector_store %arg5[%c0_8, %c0_9, %c0_10], %16 {strides = array<i32>} : memref<1x16x128xf32, #tpu.memory_space<vmem>>, vector<1x16x128xf32>,
    return
  }
  func.func @transform_0(%arg0: i32, %arg1: i32) -> (i32, i32, i32) {
    %c0_i32 = arith.constant 0 : i32
    %c0_i32_0 = arith.constant 0 : i32
    return %arg0, %c0_i32, %arg1 : i32, i32, i32
  }
  func.func @transform_1(%arg0: i32, %arg1: i32) -> (i32, i32) {
    %c0_i32 = arith.constant 0 : i32
    %c0_i32_0 = arith.constant 0 : i32
    %c0_i32_1 = arith.constant 0 : i32
    return %c0_i32, %c0_i32_0 : i32, i32
  }
  func.func @transform_2(%arg0: i32, %arg1: i32) -> (i32, i32) {
    %c0_i32 = arith.constant 0 : i32
    %c0_i32_0 = arith.constant 0 : i32
    %c0_i32_1 = arith.constant 0 : i32
    return %c0_i32, %c0_i32_0 : i32, i32
  }
  func.func @transform_3(%arg0: i32, %arg1: i32) -> (i32, i32, i32) {
    %c0_i32 = arith.constant 0 : i32
    %c0_i32_0 = arith.constant 0 : i32
    return %arg0, %c0_i32, %arg1 : i32, i32, i32
  }
}

</mosaic_0001>

<llo_original>
// kernel: f.2
$region0: #{f.2}
  #allocation0 [shape = 'u32[]', space=smem, size = 0x4, offset = 0x4, fixed_abs, tag = 'smem constant byte address 0x4 - core index']
  #allocation1 [shape = 'u32[144,128]{1,0:T(1,128)}', space=vmem, size = 0x12000, scoped, tag = 'internal scratch']
  #allocation2 [shape = 'u32[2048]{0}', space=vmem, size = 0x2000, scoped, tag = 'scoped memory for f.2']
  #allocation3 [shape = 'u32[2048]{0}', space=vmem, size = 0x2000, scoped, tag = 'scoped memory for f.2']
  #allocation4 [shape = 'u32[2048]{0}', space=vmem, size = 0x2000, scoped, tag = 'scoped memory for f.2']
  #allocation5 [shape = 'u32[2048]{0}', space=vmem, size = 0x2000, scoped, tag = 'scoped memory for f.2']
  #allocation6 [shape = 'u32[2048]{0}', space=vmem, size = 0x2000, scoped, tag = 'scoped memory for f.2']
  %s0 = inlined_call_operand.vmem [shape: f32[16,16], index: 0, kind: input, shape index: {}]
  %s1 = inlined_call_operand.vmem [shape: f32[16,1], index: 1, kind: input, shape index: {}]
  %s2 = inlined_call_operand.vmem [shape: f32[2,16,64], index: 2, kind: input, shape index: {}]
  %s3 = inlined_call_operand.<no memory space> [shape: f32[], index: 3, kind: input, shape index: {}]
  %s4 = inlined_call_operand.vmem [shape: f32[2,16,128], index: 4, kind: output, shape index: {}]
  %s5 = sld [smem:[#allocation0]]
  $region45: #{f.2} parent=0
    _
  %s7 = ssub.s32 1, %s5
  %s8 = scalar_select 0, %s7, %s5
  %v9 = vstv %s3
  loop: start=0, step=1, limit=4
  $region2: #{f.2} parent=0 // loop_pre_header
    _
  $region3: #{f.2} parent=0 // loop_header
    %s11 = sphi 0, %s15
    %p12 = scmp.ge.s32.totalorder %s11, 4
    %s18 = sphi 0, %s30
    %s19 = sphi 0, %s26
    %s20 = sphi 0, %s18
    %s21 = sphi 0, %s19
    %s22 = sphi 0, %s20
    %s23 = sphi 0, %s21
    %s35 = sphi 0, %s37
    %s38 = sphi 0, %s35
    %s39 = sphi 0, %s38
    %s55 = sphi 0, %s39
    %s59 = sphi 0, %s59
    %s61 = sphi 0, %s59
    %s62 = sphi 0, %s61
    %s76 = sphi 0, %s62
    %s80 = sphi 0, %s80
    %s82 = sphi 0, %s80
    %s83 = sphi 0, %s82
    %s97 = sphi 0, %s83
    %s105 = sphi 0, %s107
    %s108 = sphi 0, %s105
    %s109 = sphi 0, %s108
    %s125 = sphi 0, %s109
  $region4: #{f.2} parent=0 // loop_header_branch
    %14 = sbr.rel (%p12) target = $region8
  $region5: #{f.2} parent=0 // loop_body
    %s16 = ssub.s32 %s11, 1
    %s17 = ssub.s32 %s11, 2
    %s24 = sadd.s32 1, %s19
    %p25 = scmp.ge.s32.totalorder %s24, 1
    %s26 = scalar_select %p25, 0, %s24
    %s27 = sadd.s32 1, %s18
    %s28 = scalar_select %p25, %s27, %s18
    %p29 = scmp.ge.s32.totalorder %s28, 2
    %s30 = scalar_select %p29, 0, %s28
    %s31 = ssub.s32 %s18, %s30
    %s32 = ssub.s32 %s19, %s26
    %s33 = sor.u32 %s31, %s32
    %p34 = scmp.eq.s32.totalorder %s33, 0
    %s36 = sadd.s32 %s35, 1
    %s37 = scalar_select %p34, %s35, %s36
    %p40 = pneg %p34
    %p41 = scmp.eq.s32.totalorder %s11, 1
    %p42 = por %p40, %p41
    %p43 = scmp.ne.s32.totalorder %s35, %s38
    %p44 = scmp.eq.s32.totalorder %s11, 0
    %p45 = por %p43, %p44
    %p46 = scmp.ne.s32.totalorder %s35, %s38
    %p47 = scmp.eq.s32.totalorder %s16, 1
    %p48 = por %p46, %p47
    %p49 = scmp.ne.s32.totalorder %s38, %s39
    %p50 = scmp.eq.s32.totalorder %s16, 0
    %p51 = por %p49, %p50
    %p52 = scmp.ne.s32.totalorder %s38, %s39
    %p53 = scmp.eq.s32.totalorder %s17, 1
    %p54 = por %p52, %p53
    %p56 = scmp.ne.s32.totalorder %s39, %s55
    %p57 = scmp.eq.s32.totalorder %s17, 0
    %p58 = por %p56, %p57
    %s60 = sadd.s32 %s59, 1
    %p63 = scmp.eq.s32.totalorder %s11, 1
    %p64 = scmp.ne.s32.totalorder %s59, %s61
    %p65 = scmp.eq.s32.totalorder %s11, 0
    %p66 = por %p64, %p65
    %p67 = scmp.ne.s32.totalorder %s59, %s61
    %p68 = scmp.eq.s32.totalorder %s16, 1
    %p69 = por %p67, %p68
    %p70 = scmp.ne.s32.totalorder %s61, %s62
    %p71 = scmp.eq.s32.totalorder %s16, 0
    %p72 = por %p70, %p71
    %p73 = scmp.ne.s32.totalorder %s61, %s62
    %p74 = scmp.eq.s32.totalorder %s17, 1
    %p75 = por %p73, %p74
    %p77 = scmp.ne.s32.totalorder %s62, %s76
    %p78 = scmp.eq.s32.totalorder %s17, 0
    %p79 = por %p77, %p78
    %s81 = sadd.s32 %s80, 1
    %p84 = scmp.eq.s32.totalorder %s11, 1
    %p85 = scmp.ne.s32.totalorder %s80, %s82
    %p86 = scmp.eq.s32.totalorder %s11, 0
    %p87 = por %p85, %p86
    %p88 = scmp.ne.s32.totalorder %s80, %s82
    %p89 = scmp.eq.s32.totalorder %s16, 1
    %p90 = por %p88, %p89
    %p91 = scmp.ne.s32.totalorder %s82, %s83
    %p92 = scmp.eq.s32.totalorder %s16, 0
    %p93 = por %p91, %p92
    %p94 = scmp.ne.s32.totalorder %s82, %s83
    %p95 = scmp.eq.s32.totalorder %s17, 1
    %p96 = por %p94, %p95
    %p98 = scmp.ne.s32.totalorder %s83, %s97
    %p99 = scmp.eq.s32.totalorder %s17, 0
    %p100 = por %p98, %p99
    %s101 = ssub.s32 %s18, %s30
    %s102 = ssub.s32 %s19, %s26
    %s103 = sor.u32 %s101, %s102
    %p104 = scmp.eq.s32.totalorder %s103, 0
    %s106 = sadd.s32 %s105, 1
    %s107 = scalar_select %p104, %s105, %s106
    %p110 = pneg %p104
    %p111 = scmp.eq.s32.totalorder %s11, 1
    %p112 = por %p110, %p111
    %p113 = scmp.ne.s32.totalorder %s105, %s108
    %p114 = scmp.eq.s32.totalorder %s11, 0
    %p115 = por %p113, %p114
    %p116 = scmp.ne.s32.totalorder %s105, %s108
    %p117 = scmp.eq.s32.totalorder %s16, 1
    %p118 = por %p116, %p117
    %p119 = scmp.ne.s32.totalorder %s108, %s109
    %p120 = scmp.eq.s32.totalorder %s16, 0
    %p121 = por %p119, %p120
    %p122 = scmp.ne.s32.totalorder %s108, %s109
    %p123 = scmp.eq.s32.totalorder %s17, 1
    %p124 = por %p122, %p123
    %p126 = scmp.ne.s32.totalorder %s109, %s125
    %p127 = scmp.eq.s32.totalorder %s17, 0
    %p128 = por %p126, %p127
    %p129 = scmp.le.s32.totalorder 1, %s11
    %p130 = scmp.lt.s32.totalorder %s11, 3
    %p131 = pnand %p129, %p130
    %p132 = pneg %p131
    // Predicated region
    $region9: #{f.2} parent=5 // pred_check
      _
    $region10: #{f.2} parent=5 // pred_check_branch
      %134 = sbr.rel (%p131) target = $region12
    $region11: #{f.2} parent=5 // pred_region
      %s135 = ssub.s32 %s11, 1
      // Predicated region
      $region13: #{f.2} parent=11 // pred_check
        %p136 = pneg %p72
      $region14: #{f.2} parent=11 // pred_check_branch
        %138 = sbr.rel (%p136) target = $region16
      $region15: #{f.2} parent=11 // pred_region
        _
      $region16: #{f.2} parent=11 // pred_fallthru
        _
      // Predicated region
      $region17: #{f.2} parent=11 // pred_check
        %p139 = pneg %p93
      $region18: #{f.2} parent=11 // pred_check_branch
        %141 = sbr.rel (%p139) target = $region20
      $region19: #{f.2} parent=11 // pred_region
        _
      $region20: #{f.2} parent=11 // pred_fallthru
        _
    $region12: #{f.2} parent=5 // pred_fallthru
      _
    %p142 = scmp.lt.s32.totalorder %s11, 2
    // Predicated region
    $region21: #{f.2} parent=5 // pred_check
      %p143 = pneg %p142
    $region22: #{f.2} parent=5 // pred_check_branch
      %145 = sbr.rel (%p143) target = $region24
    $region23: #{f.2} parent=5 // pred_region
      // Predicated region
      $region25: #{f.2} parent=23 // pred_check
        %p146 = pneg %p45
      $region26: #{f.2} parent=23 // pred_check_branch
        %148 = sbr.rel (%p146) target = $region28
      $region27: #{f.2} parent=23 // pred_region
        %s149 = ssub.s32 1, %s19
        %s150 = smul.u32 256, %s149
        %p151 = scmp.lt.s32.totalorder %s18, 1
        %s152 = scalar_select %p151, %s18, 1
        %p153 = scmp.lt.s32.totalorder %s19, 0
        %s154 = scalar_select %p153, %s19, 0
        %s155 = smul.addr %s152, 2
        %s156 = sadd.s32 %s154, %s155
        %s157 = smul.addr %s156, 8
        %s158 = scalar_lea.vmem %s2, %s157
        %s159 = ssub.s32 1, %s19
        %s160 = smul.u32 256, %s159
      $region28: #{f.2} parent=23 // pred_fallthru
        _
    $region24: #{f.2} parent=5 // pred_fallthru
      _
    %p161 = scmp.le.s32.totalorder 1, %s11
    %p162 = scmp.lt.s32.totalorder %s11, 3
    %p163 = pnand %p161, %p162
    %p164 = pneg %p163
    // Predicated region
    $region29: #{f.2} parent=5 // pred_check
      _
    $region30: #{f.2} parent=5 // pred_check_branch
      %166 = sbr.rel (%p163) target = $region32
    $region31: #{f.2} parent=5 // pred_region
      #allocation7 [shape = 'u8[8192]{0}', space=vmem, size = 0x2000, dematerialized = true, scoped, tag = 'FusionAdapter Buffer %fusion.1 = f32[2,16,128]{2,1,0:T(8,128)} fusion(%param_2.4, %param_3.4), kind=kLoop, calls=%fused_computation.2.clone, metadata={op_name="jit(f)/jit(_pad)/pad" stack_frame_id=16}']
      %s167 = ssub.s32 %s11, 1
      %s168 = ssub.s32 1, %s21
      %s169 = smul.u32 256, %s168
      %p170 = scmp.lt.s32.totalorder %s20, 1
      %s171 = scalar_select %p170, %s20, 1
      %p172 = scmp.lt.s32.totalorder %s21, 0
      %s173 = scalar_select %p172, %s21, 0
      %s174 = smul.addr %s171, 2
      %s175 = sadd.s32 %s173, %s174
      %s176 = smul.addr %s175, 8
      %s177 = scalar_lea.vmem %s2, %s176
      %p178 = pneg %p51
      %p179 = pneg %p48
      %p180 = pneg %p72
      %p181 = pneg %p69
      %p182 = pneg %p93
      %p183 = pneg %p90
      %p184 = pneg %p121
      %p185 = pneg %p118
      %p186 = scmp.lt.s32.totalorder %s20, 1
      %s187 = scalar_select %p186, %s20, 1
      %p188 = scmp.lt.s32.totalorder %s21, 0
      %s189 = scalar_select %p188, %s21, 0
      %s190 = smul.addr %s187, 2
      %s191 = sadd.s32 %s189, %s190
      %s192 = smul.addr %s191, 8
      %s193 = scalar_lea.vmem %s4, %s192
      %s194 = ssub.s32 1, %s21
      %s195 = smul.u32 256, %s194
      %p196 = scmp.lt.s32.totalorder %s20, 1
      %s197 = scalar_select %p196, %s20, 1
      %p198 = scmp.lt.s32.totalorder %s21, 0
      %s199 = scalar_select %p198, %s21, 0
      %s200 = smul.addr %s197, 2
      %s201 = sadd.s32 %s199, %s200
      %s202 = smul.addr %s201, 8
      %s203 = scalar_lea.vmem %s2, %s202
      %s204 = ssub.s32 1, %s21
      %s205 = smul.u32 256, %s204
      %p206 = scmp.lt.s32.totalorder %s20, 1
      %s207 = scalar_select %p206, %s20, 1
      %p208 = scmp.lt.s32.totalorder %s21, 0
      %s209 = scalar_select %p208, %s21, 0
      %s210 = smul.addr %s207, 2
      %s211 = sadd.s32 %s209, %s210
      %s212 = smul.addr %s211, 8
      %s213 = scalar_lea.vmem %s4, %s212
      %s214 = ssub.s32 0, %s21
      %p215 = scmp.lt.s32.totalorder %s214, 0
      %s216 = scalar_select %p215, 0, 255
      %v217 = vld [vmem:[%s203] sm:%s216]
      %s218 = ssub.s32 0, %s21
      %v219 = vstv %s218
      %vm220 = vcmp.lt.s32.totalorder %v219, 0
      %v221 = vsel %vm220, %v9, %v217
      %s222 = smul.addr %s21, 128
      %v223 = vlaneseq
      %v224 = vand.u32 %v223, 127
      %v225 = vstv %s222
      %v226 = vadd.s32 %v224, %v225
      %vm227 = vcmp.lt.s32.totalorder %v226, 64
      %v228 = vsel %vm227, %v221, %v9
      %s230 = ssub.s32 256, 1
      %231 = vst [vmem:[#allocation7] sm:%s230] %v228
      %s232 = scalar_lea.vmem %s203, 8
      %s233 = ssub.s32 0, %s21
      %p234 = scmp.lt.s32.totalorder %s233, 0
      %s235 = scalar_select %p234, 0, 255
      %v236 = vld [vmem:[%s232] sm:%s235]
      %s237 = ssub.s32 0, %s21
      %v238 = vstv %s237
      %vm239 = vcmp.lt.s32.totalorder %v238, 0
      %v240 = vsel %vm239, %v9, %v236
      %s241 = smul.addr %s21, 128
      %v242 = vlaneseq
      %v243 = vand.u32 %v242, 127
      %v244 = vstv %s241
      %v245 = vadd.s32 %v243, %v244
      %vm246 = vcmp.lt.s32.totalorder %v245, 64
      %v247 = vsel %vm246, %v240, %v9
      %s248 = scalar_lea.vmem [#allocation7], 8
      %s250 = ssub.s32 256, 1
      %251 = vst [vmem:[%s248] sm:%s250] %v247
      %v252 = vld [vmem:[%s0] sm:$0xff]
      %v253 = vld [vmem:[%s0 + $0x8] sm:$0xff]
      %v254 = vld [vmem:[#allocation7] sm:$0xff]
      %v255 = vld [vmem:[#allocation7 + $0x8] sm:$0xff]
      %v256 = vld [vmem:[%s1] sm:$0xff]
      %v257 = vld [vmem:[%s1 + $0x8] sm:$0xff]
      %259 = vset.pattern.permute.xlu0 0
      %260 = vperm.xlu0 %259, %v256
      %v261 = vpop.permute.xlu0 %260
      %264 = vset.pattern.permute.xlu0 0
      %265 = vperm.xlu0 %264, %v257
      %v266 = vpop.permute.xlu0 %265
      %vm268 = vcmask 130048
      %v270 = vsel %vm268, %v252, 0
      %v273 = vsel %vm268, %v253, 0
      %275 = vmatprep.subr.mxu0 0.0
      %276 = vmatpush1.msra.mxu0 0.0
      %277 = vmatprep.subr.mxu0 0.0
      %278 = vmatpush1.msra.mxu0 0.0
      %279 = vmatprep.subr.mxu0 0.0
      %280 = vmatpush1.msra.mxu0 0.0
      %281 = vmatprep.subr.mxu0 0.0
      %282 = vmatpush1.msra.mxu0 0.0
      %283 = vmatprep.subr.mxu0 0.0
      %284 = vmatpush1.msra.mxu0 0.0
      %285 = vmatprep.subr.mxu0 0.0
      %286 = vmatpush1.msra.mxu0 0.0
      %287 = vmatprep.subr.mxu0 0.0
      %288 = vmatpush1.msra.mxu0 0.0
      %289 = vmatprep.subr.mxu0 0.0
      %290 = vmatpush1.msra.mxu0 0.0
      %291 = vmatprep.subr.mxu0 0.0
      %292 = vmatpush1.msra.mxu0 0.0
      %293 = vmatprep.subr.mxu0 0.0
      %294 = vmatpush1.msra.mxu0 0.0
      %295 = vmatprep.subr.mxu0 0.0
      %296 = vmatpush1.msra.mxu0 0.0
      %297 = vmatprep.subr.mxu0 0.0
      %298 = vmatpush1.msra.mxu0 0.0
      %299 = vmatprep.subr.mxu0 0.0
      %300 = vmatpush1.msra.mxu0 0.0
      %301 = vmatprep.subr.mxu0 0.0
      %302 = vmatpush1.msra.mxu0 0.0
      %303 = vmatprep.subr.mxu0 0.0
      %304 = vmatpush1.msra.mxu0 %v255
      %305 = vmatprep.subr.mxu0 0.0
      %306 = vmatpush1.msra.mxu0 %v254
      %307 = vmatprep.subr.mxu0 0.0
      %308 = vmatpush2.msra.mxu0 0.0
      %309 = vmatprep.subr.mxu0 0.0
      %310 = vmatpush2.msra.mxu0 0.0
      %311 = vmatprep.subr.mxu0 0.0
      %312 = vmatpush2.msra.mxu0 0.0
      %313 = vmatprep.subr.mxu0 0.0
      %314 = vmatpush2.msra.mxu0 0.0
      %315 = vmatprep.subr.mxu0 0.0
      %316 = vmatpush2.msra.mxu0 0.0
      %317 = vmatprep.subr.mxu0 0.0
      %318 = vmatpush2.msra.mxu0 0.0
      %319 = vmatprep.subr.mxu0 0.0
      %320 = vmatpush2.msra.mxu0 0.0
      %321 = vmatprep.subr.mxu0 0.0
      %322 = vmatpush2.msra.mxu0 0.0
      %323 = vmatprep.subr.mxu0 0.0
      %324 = vmatpush2.msra.mxu0 0.0
      %325 = vmatprep.subr.mxu0 0.0
      %326 = vmatpush2.msra.mxu0 0.0
      %327 = vmatprep.subr.mxu0 0.0
      %328 = vmatpush2.msra.mxu0 0.0
      %329 = vmatprep.subr.mxu0 0.0
      %330 = vmatpush2.msra.mxu0 0.0
      %331 = vmatprep.subr.mxu0 0.0
      %332 = vmatpush2.msra.mxu0 0.0
      %333 = vmatprep.subr.mxu0 0.0
      %334 = vmatpush2.msra.mxu0 0.0
      %335 = vmatprep.subr.mxu0 0.0
      %336 = vmatpush2.msra.mxu0 0.0
      %337 = vmatprep.subr.mxu0 0.0
      %338 = vmatpush2.msra.mxu0 0.0
      %339 = vmatprep.mubr.f32.mxu0 0.0
      %340 = vmatmul.mubr.f32.gmra.mxu0 %v270
      %v341 = vpop.f32.mrf.mxu0
      %v342 = vadd.f32 %v261, %v341
      %v343 = vpop.f32.mrf.mxu0
      %344 = vmatprep.mubr.f32.mxu0 0.0
      %345 = vmatmul.mubr.f32.gmra.mxu0 %v273
      %v346 = vpop.f32.mrf.mxu0
      %v347 = vadd.f32 %v266, %v346
      %v348 = vpop.f32.mrf.mxu0
      %349 = vdwg.mxu0
      %v350 = vsub.f32 0.0, %v342
      %v351 = vsub.f32 0.0, %v347
      %v352 = vmul.f32 %v350, 1.442695
      %v353 = vpow.pop %v352
      %v354 = vmul.f32 %v351, 1.442695
      %v355 = vpow.pop %v354
      %v356 = vadd.f32 %v353, 1.0
      %v357 = vadd.f32 %v355, 1.0
      %v358 = vrcp.pop %v356
      %v359 = vrcp.pop %v357
      %v360 = vmul.f32 %v342, %v358
      %v361 = vmul.f32 %v347, %v359
      %362 = vst [vmem:[%s213] sm:$0xff] %v360
      %363 = vst [vmem:[%s213 + $0x8] sm:$0xff] %v361
      %p364 = scmp.lt.s32.totalorder %s20, 1
      %s365 = scalar_select %p364, %s20, 1
      %p366 = scmp.lt.s32.totalorder %s21, 0
      %s367 = scalar_select %p366, %s21, 0
      %s368 = smul.addr %s365, 2
      %s369 = sadd.s32 %s367, %s368
      %s370 = smul.addr %s369, 8
      %s371 = scalar_lea.vmem %s4, %s370
      // Predicated region
      $region33: #{f.2} parent=31 // pred_check
        %p372 = pneg %p118
      $region34: #{f.2} parent=31 // pred_check_branch
        %374 = sbr.rel (%p372) target = $region36
      $region35: #{f.2} parent=31 // pred_region
        _
      $region36: #{f.2} parent=31 // pred_fallthru
        _
    $region32: #{f.2} parent=5 // pred_fallthru
      _
    %p375 = scmp.le.s32.totalorder 2, %s11
    // Predicated region
    $region37: #{f.2} parent=5 // pred_check
      %p376 = pneg %p375
    $region38: #{f.2} parent=5 // pred_check_branch
      %378 = sbr.rel (%p376) target = $region40
    $region39: #{f.2} parent=5 // pred_region
      %s379 = ssub.s32 %s11, 2
      // Predicated region
      $region41: #{f.2} parent=39 // pred_check
        %p380 = pneg %p124
      $region42: #{f.2} parent=39 // pred_check_branch
        %382 = sbr.rel (%p380) target = $region44
      $region43: #{f.2} parent=39 // pred_region
        %p383 = scmp.lt.s32.totalorder %s22, 1
        %s384 = scalar_select %p383, %s22, 1
        %p385 = scmp.lt.s32.totalorder %s23, 0
        %s386 = scalar_select %p385, %s23, 0
        %s387 = smul.addr %s384, 2
        %s388 = sadd.s32 %s386, %s387
        %s389 = smul.addr %s388, 8
        %s390 = scalar_lea.vmem %s4, %s389
      $region44: #{f.2} parent=39 // pred_fallthru
        _
    $region40: #{f.2} parent=5 // pred_fallthru
      _
  $region6: #{f.2} parent=0 // loop_footer
    %s15 = sadd.s32 1, %s11
  $region7: #{f.2} parent=0 // loop_footer_branch
    %10 = sbr.rel target = $region3
  $region8: #{f.2} parent=0 // loop_exit
    _

// kernel: f.1
$region0: #{f.1}
  #allocation0 [shape = 'u32[]', space=smem, size = 0x4, offset = 0x4, fixed_abs, tag = 'smem constant byte address 0x4 - core index']
  #allocation1 [shape = 'u32[144,128]{1,0:T(1,128)}', space=vmem, size = 0x12000, scoped, tag = 'internal scratch']
  %s0 = inlined_call_operand.vmem [shape: f32[2,16,128], index: 0, kind: input, shape index: {}]
  %s1 = inlined_call_operand.vmem [shape: f32[16,16], index: 1, kind: input, shape index: {}]
  %s2 = inlined_call_operand.vmem [shape: f32[16,1], index: 2, kind: input, shape index: {}]
  %s3 = inlined_call_operand.vmem [shape: f32[2,16,128], index: 3, kind: output, shape index: {}]
  %s4 = sld [smem:[#allocation0]]
  $region45: #{f.1} parent=0
    _
  %s6 = ssub.s32 1, %s4
  %s7 = scalar_select 0, %s6, %s4
  loop: start=0, step=1, limit=4
  $region2: #{f.1} parent=0 // loop_pre_header
    _
  $region3: #{f.1} parent=0 // loop_header
    %s9 = sphi 0, %s13
    %p10 = scmp.ge.s32.totalorder %s9, 4
    %s16 = sphi 0, %s28
    %s17 = sphi 0, %s24
    %s18 = sphi 0, %s16
    %s19 = sphi 0, %s17
    %s20 = sphi 0, %s18
    %s21 = sphi 0, %s19
    %s33 = sphi 0, %s35
    %s36 = sphi 0, %s33
    %s37 = sphi 0, %s36
    %s53 = sphi 0, %s37
    %s57 = sphi 0, %s57
    %s59 = sphi 0, %s57
    %s60 = sphi 0, %s59
    %s74 = sphi 0, %s60
    %s78 = sphi 0, %s78
    %s80 = sphi 0, %s78
    %s81 = sphi 0, %s80
    %s95 = sphi 0, %s81
    %s103 = sphi 0, %s105
    %s106 = sphi 0, %s103
    %s107 = sphi 0, %s106
    %s123 = sphi 0, %s107
  $region4: #{f.1} parent=0 // loop_header_branch
    %12 = sbr.rel (%p10) target = $region8
  $region5: #{f.1} parent=0 // loop_body
    %s14 = ssub.s32 %s9, 1
    %s15 = ssub.s32 %s9, 2
    %s22 = sadd.s32 1, %s17
    %p23 = scmp.ge.s32.totalorder %s22, 1
    %s24 = scalar_select %p23, 0, %s22
    %s25 = sadd.s32 1, %s16
    %s26 = scalar_select %p23, %s25, %s16
    %p27 = scmp.ge.s32.totalorder %s26, 2
    %s28 = scalar_select %p27, 0, %s26
    %s29 = ssub.s32 %s16, %s28
    %s30 = ssub.s32 %s17, %s24
    %s31 = sor.u32 %s29, %s30
    %p32 = scmp.eq.s32.totalorder %s31, 0
    %s34 = sadd.s32 %s33, 1
    %s35 = scalar_select %p32, %s33, %s34
    %p38 = pneg %p32
    %p39 = scmp.eq.s32.totalorder %s9, 1
    %p40 = por %p38, %p39
    %p41 = scmp.ne.s32.totalorder %s33, %s36
    %p42 = scmp.eq.s32.totalorder %s9, 0
    %p43 = por %p41, %p42
    %p44 = scmp.ne.s32.totalorder %s33, %s36
    %p45 = scmp.eq.s32.totalorder %s14, 1
    %p46 = por %p44, %p45
    %p47 = scmp.ne.s32.totalorder %s36, %s37
    %p48 = scmp.eq.s32.totalorder %s14, 0
    %p49 = por %p47, %p48
    %p50 = scmp.ne.s32.totalorder %s36, %s37
    %p51 = scmp.eq.s32.totalorder %s15, 1
    %p52 = por %p50, %p51
    %p54 = scmp.ne.s32.totalorder %s37, %s53
    %p55 = scmp.eq.s32.totalorder %s15, 0
    %p56 = por %p54, %p55
    %s58 = sadd.s32 %s57, 1
    %p61 = scmp.eq.s32.totalorder %s9, 1
    %p62 = scmp.ne.s32.totalorder %s57, %s59
    %p63 = scmp.eq.s32.totalorder %s9, 0
    %p64 = por %p62, %p63
    %p65 = scmp.ne.s32.totalorder %s57, %s59
    %p66 = scmp.eq.s32.totalorder %s14, 1
    %p67 = por %p65, %p66
    %p68 = scmp.ne.s32.totalorder %s59, %s60
    %p69 = scmp.eq.s32.totalorder %s14, 0
    %p70 = por %p68, %p69
    %p71 = scmp.ne.s32.totalorder %s59, %s60
    %p72 = scmp.eq.s32.totalorder %s15, 1
    %p73 = por %p71, %p72
    %p75 = scmp.ne.s32.totalorder %s60, %s74
    %p76 = scmp.eq.s32.totalorder %s15, 0
    %p77 = por %p75, %p76
    %s79 = sadd.s32 %s78, 1
    %p82 = scmp.eq.s32.totalorder %s9, 1
    %p83 = scmp.ne.s32.totalorder %s78, %s80
    %p84 = scmp.eq.s32.totalorder %s9, 0
    %p85 = por %p83, %p84
    %p86 = scmp.ne.s32.totalorder %s78, %s80
    %p87 = scmp.eq.s32.totalorder %s14, 1
    %p88 = por %p86, %p87
    %p89 = scmp.ne.s32.totalorder %s80, %s81
    %p90 = scmp.eq.s32.totalorder %s14, 0
    %p91 = por %p89, %p90
    %p92 = scmp.ne.s32.totalorder %s80, %s81
    %p93 = scmp.eq.s32.totalorder %s15, 1
    %p94 = por %p92, %p93
    %p96 = scmp.ne.s32.totalorder %s81, %s95
    %p97 = scmp.eq.s32.totalorder %s15, 0
    %p98 = por %p96, %p97
    %s99 = ssub.s32 %s16, %s28
    %s100 = ssub.s32 %s17, %s24
    %s101 = sor.u32 %s99, %s100
    %p102 = scmp.eq.s32.totalorder %s101, 0
    %s104 = sadd.s32 %s103, 1
    %s105 = scalar_select %p102, %s103, %s104
    %p108 = pneg %p102
    %p109 = scmp.eq.s32.totalorder %s9, 1
    %p110 = por %p108, %p109
    %p111 = scmp.ne.s32.totalorder %s103, %s106
    %p112 = scmp.eq.s32.totalorder %s9, 0
    %p113 = por %p111, %p112
    %p114 = scmp.ne.s32.totalorder %s103, %s106
    %p115 = scmp.eq.s32.totalorder %s14, 1
    %p116 = por %p114, %p115
    %p117 = scmp.ne.s32.totalorder %s106, %s107
    %p118 = scmp.eq.s32.totalorder %s14, 0
    %p119 = por %p117, %p118
    %p120 = scmp.ne.s32.totalorder %s106, %s107
    %p121 = scmp.eq.s32.totalorder %s15, 1
    %p122 = por %p120, %p121
    %p124 = scmp.ne.s32.totalorder %s107, %s123
    %p125 = scmp.eq.s32.totalorder %s15, 0
    %p126 = por %p124, %p125
    %p127 = scmp.le.s32.totalorder 1, %s9
    %p128 = scmp.lt.s32.totalorder %s9, 3
    %p129 = pnand %p127, %p128
    %p130 = pneg %p129
    // Predicated region
    $region9: #{f.1} parent=5 // pred_check
      _
    $region10: #{f.1} parent=5 // pred_check_branch
      %132 = sbr.rel (%p129) target = $region12
    $region11: #{f.1} parent=5 // pred_region
      %s133 = ssub.s32 %s9, 1
      // Predicated region
      $region13: #{f.1} parent=11 // pred_check
        %p134 = pneg %p70
      $region14: #{f.1} parent=11 // pred_check_branch
        %136 = sbr.rel (%p134) target = $region16
      $region15: #{f.1} parent=11 // pred_region
        _
      $region16: #{f.1} parent=11 // pred_fallthru
        _
      // Predicated region
      $region17: #{f.1} parent=11 // pred_check
        %p137 = pneg %p91
      $region18: #{f.1} parent=11 // pred_check_branch
        %139 = sbr.rel (%p137) target = $region20
      $region19: #{f.1} parent=11 // pred_region
        _
      $region20: #{f.1} parent=11 // pred_fallthru
        _
    $region12: #{f.1} parent=5 // pred_fallthru
      _
    %p140 = scmp.lt.s32.totalorder %s9, 2
    // Predicated region
    $region21: #{f.1} parent=5 // pred_check
      %p141 = pneg %p140
    $region22: #{f.1} parent=5 // pred_check_branch
      %143 = sbr.rel (%p141) target = $region24
    $region23: #{f.1} parent=5 // pred_region
      // Predicated region
      $region25: #{f.1} parent=23 // pred_check
        %p144 = pneg %p43
      $region26: #{f.1} parent=23 // pred_check_branch
        %146 = sbr.rel (%p144) target = $region28
      $region27: #{f.1} parent=23 // pred_region
        %p147 = scmp.lt.s32.totalorder %s16, 1
        %s148 = scalar_select %p147, %s16, 1
        %p149 = scmp.lt.s32.totalorder %s17, 0
        %s150 = scalar_select %p149, %s17, 0
        %s151 = smul.addr %s148, 2
        %s152 = sadd.s32 %s150, %s151
        %s153 = smul.addr %s152, 8
        %s154 = scalar_lea.vmem %s0, %s153
      $region28: #{f.1} parent=23 // pred_fallthru
        _
    $region24: #{f.1} parent=5 // pred_fallthru
      _
    %p155 = scmp.le.s32.totalorder 1, %s9
    %p156 = scmp.lt.s32.totalorder %s9, 3
    %p157 = pnand %p155, %p156
    %p158 = pneg %p157
    // Predicated region
    $region29: #{f.1} parent=5 // pred_check
      _
    $region30: #{f.1} parent=5 // pred_check_branch
      %160 = sbr.rel (%p157) target = $region32
    $region31: #{f.1} parent=5 // pred_region
      %s161 = ssub.s32 %s9, 1
      %p162 = scmp.lt.s32.totalorder %s18, 1
      %s163 = scalar_select %p162, %s18, 1
      %p164 = scmp.lt.s32.totalorder %s19, 0
      %s165 = scalar_select %p164, %s19, 0
      %s166 = smul.addr %s163, 2
      %s167 = sadd.s32 %s165, %s166
      %s168 = smul.addr %s167, 8
      %s169 = scalar_lea.vmem %s0, %s168
      %p170 = pneg %p49
      %p171 = pneg %p46
      %p172 = pneg %p70
      %p173 = pneg %p67
      %p174 = pneg %p91
      %p175 = pneg %p88
      %p176 = pneg %p119
      %p177 = pneg %p116
      %p178 = scmp.lt.s32.totalorder %s18, 1
      %s179 = scalar_select %p178, %s18, 1
      %p180 = scmp.lt.s32.totalorder %s19, 0
      %s181 = scalar_select %p180, %s19, 0
      %s182 = smul.addr %s179, 2
      %s183 = sadd.s32 %s181, %s182
      %s184 = smul.addr %s183, 8
      %s185 = scalar_lea.vmem %s3, %s184
      %p186 = scmp.lt.s32.totalorder %s18, 1
      %s187 = scalar_select %p186, %s18, 1
      %p188 = scmp.lt.s32.totalorder %s19, 0
      %s189 = scalar_select %p188, %s19, 0
      %s190 = smul.addr %s187, 2
      %s191 = sadd.s32 %s189, %s190
      %s192 = smul.addr %s191, 8
      %s193 = scalar_lea.vmem %s0, %s192
      %p194 = scmp.lt.s32.totalorder %s18, 1
      %s195 = scalar_select %p194, %s18, 1
      %p196 = scmp.lt.s32.totalorder %s19, 0
      %s197 = scalar_select %p196, %s19, 0
      %s198 = smul.addr %s195, 2
      %s199 = sadd.s32 %s197, %s198
      %s200 = smul.addr %s199, 8
      %s201 = scalar_lea.vmem %s3, %s200
      %v202 = vld [vmem:[%s1] sm:$0xff]
      %v203 = vld [vmem:[%s1 + $0x8] sm:$0xff]
      %v204 = vld [vmem:[%s193] sm:$0xff]
      %v205 = vld [vmem:[%s193 + $0x8] sm:$0xff]
      %v206 = vld [vmem:[%s2] sm:$0xff]
      %v207 = vld [vmem:[%s2 + $0x8] sm:$0xff]
      %209 = vset.pattern.permute.xlu0 0
      %210 = vperm.xlu0 %209, %v206
      %v211 = vpop.permute.xlu0 %210
      %214 = vset.pattern.permute.xlu0 0
      %215 = vperm.xlu0 %214, %v207
      %v216 = vpop.permute.xlu0 %215
      %vm218 = vcmask 130048
      %v220 = vsel %vm218, %v202, 0
      %v223 = vsel %vm218, %v203, 0
      %225 = vmatprep.subr.mxu0 0.0
      %226 = vmatpush1.msra.mxu0 0.0
      %227 = vmatprep.subr.mxu0 0.0
      %228 = vmatpush1.msra.mxu0 0.0
      %229 = vmatprep.subr.mxu0 0.0
      %230 = vmatpush1.msra.mxu0 0.0
      %231 = vmatprep.subr.mxu0 0.0
      %232 = vmatpush1.msra.mxu0 0.0
      %233 = vmatprep.subr.mxu0 0.0
      %234 = vmatpush1.msra.mxu0 0.0
      %235 = vmatprep.subr.mxu0 0.0
      %236 = vmatpush1.msra.mxu0 0.0
      %237 = vmatprep.subr.mxu0 0.0
      %238 = vmatpush1.msra.mxu0 0.0
      %239 = vmatprep.subr.mxu0 0.0
      %240 = vmatpush1.msra.mxu0 0.0
      %241 = vmatprep.subr.mxu0 0.0
      %242 = vmatpush1.msra.mxu0 0.0
      %243 = vmatprep.subr.mxu0 0.0
      %244 = vmatpush1.msra.mxu0 0.0
      %245 = vmatprep.subr.mxu0 0.0
      %246 = vmatpush1.msra.mxu0 0.0
      %247 = vmatprep.subr.mxu0 0.0
      %248 = vmatpush1.msra.mxu0 0.0
      %249 = vmatprep.subr.mxu0 0.0
      %250 = vmatpush1.msra.mxu0 0.0
      %251 = vmatprep.subr.mxu0 0.0
      %252 = vmatpush1.msra.mxu0 0.0
      %253 = vmatprep.subr.mxu0 0.0
      %254 = vmatpush1.msra.mxu0 %v205
      %255 = vmatprep.subr.mxu0 0.0
      %256 = vmatpush1.msra.mxu0 %v204
      %257 = vmatprep.subr.mxu0 0.0
      %258 = vmatpush2.msra.mxu0 0.0
      %259 = vmatprep.subr.mxu0 0.0
      %260 = vmatpush2.msra.mxu0 0.0
      %261 = vmatprep.subr.mxu0 0.0
      %262 = vmatpush2.msra.mxu0 0.0
      %263 = vmatprep.subr.mxu0 0.0
      %264 = vmatpush2.msra.mxu0 0.0
      %265 = vmatprep.subr.mxu0 0.0
      %266 = vmatpush2.msra.mxu0 0.0
      %267 = vmatprep.subr.mxu0 0.0
      %268 = vmatpush2.msra.mxu0 0.0
      %269 = vmatprep.subr.mxu0 0.0
      %270 = vmatpush2.msra.mxu0 0.0
      %271 = vmatprep.subr.mxu0 0.0
      %272 = vmatpush2.msra.mxu0 0.0
      %273 = vmatprep.subr.mxu0 0.0
      %274 = vmatpush2.msra.mxu0 0.0
      %275 = vmatprep.subr.mxu0 0.0
      %276 = vmatpush2.msra.mxu0 0.0
      %277 = vmatprep.subr.mxu0 0.0
      %278 = vmatpush2.msra.mxu0 0.0
      %279 = vmatprep.subr.mxu0 0.0
      %280 = vmatpush2.msra.mxu0 0.0
      %281 = vmatprep.subr.mxu0 0.0
      %282 = vmatpush2.msra.mxu0 0.0
      %283 = vmatprep.subr.mxu0 0.0
      %284 = vmatpush2.msra.mxu0 0.0
      %285 = vmatprep.subr.mxu0 0.0
      %286 = vmatpush2.msra.mxu0 0.0
      %287 = vmatprep.subr.mxu0 0.0
      %288 = vmatpush2.msra.mxu0 0.0
      %289 = vmatprep.mubr.f32.mxu0 0.0
      %290 = vmatmul.mubr.f32.gmra.mxu0 %v220
      %v291 = vpop.f32.mrf.mxu0
      %v292 = vadd.f32 %v211, %v291
      %v293 = vpop.f32.mrf.mxu0
      %294 = vmatprep.mubr.f32.mxu0 0.0
      %295 = vmatmul.mubr.f32.gmra.mxu0 %v223
      %v296 = vpop.f32.mrf.mxu0
      %v297 = vadd.f32 %v216, %v296
      %v298 = vpop.f32.mrf.mxu0
      %299 = vdwg.mxu0
      %v300 = vsub.f32 0.0, %v292
      %v301 = vsub.f32 0.0, %v297
      %v302 = vmul.f32 %v300, 1.442695
      %v303 = vpow.pop %v302
      %v304 = vmul.f32 %v301, 1.442695
      %v305 = vpow.pop %v304
      %v306 = vadd.f32 %v303, 1.0
      %v307 = vadd.f32 %v305, 1.0
      %v308 = vrcp.pop %v306
      %v309 = vrcp.pop %v307
      %v310 = vmul.f32 %v292, %v308
      %v311 = vmul.f32 %v297, %v309
      %312 = vst [vmem:[%s201] sm:$0xff] %v310
      %313 = vst [vmem:[%s201 + $0x8] sm:$0xff] %v311
      %p314 = scmp.lt.s32.totalorder %s18, 1
      %s315 = scalar_select %p314, %s18, 1
      %p316 = scmp.lt.s32.totalorder %s19, 0
      %s317 = scalar_select %p316, %s19, 0
      %s318 = smul.addr %s315, 2
      %s319 = sadd.s32 %s317, %s318
      %s320 = smul.addr %s319, 8
      %s321 = scalar_lea.vmem %s3, %s320
      // Predicated region
      $region33: #{f.1} parent=31 // pred_check
        %p322 = pneg %p116
      $region34: #{f.1} parent=31 // pred_check_branch
        %324 = sbr.rel (%p322) target = $region36
      $region35: #{f.1} parent=31 // pred_region
        _
      $region36: #{f.1} parent=31 // pred_fallthru
        _
    $region32: #{f.1} parent=5 // pred_fallthru
      _
    %p325 = scmp.le.s32.totalorder 2, %s9
    // Predicated region
    $region37: #{f.1} parent=5 // pred_check
      %p326 = pneg %p325
    $region38: #{f.1} parent=5 // pred_check_branch
      %328 = sbr.rel (%p326) target = $region40
    $region39: #{f.1} parent=5 // pred_region
      %s329 = ssub.s32 %s9, 2
      // Predicated region
      $region41: #{f.1} parent=39 // pred_check
        %p330 = pneg %p122
      $region42: #{f.1} parent=39 // pred_check_branch
        %332 = sbr.rel (%p330) target = $region44
      $region43: #{f.1} parent=39 // pred_region
        %p333 = scmp.lt.s32.totalorder %s20, 1
        %s334 = scalar_select %p333, %s20, 1
        %p335 = scmp.lt.s32.totalorder %s21, 0
        %s336 = scalar_select %p335, %s21, 0
        %s337 = smul.addr %s334, 2
        %s338 = sadd.s32 %s336, %s337
        %s339 = smul.addr %s338, 8
        %s340 = scalar_lea.vmem %s3, %s339
      $region44: #{f.1} parent=39 // pred_fallthru
        _
    $region40: #{f.1} parent=5 // pred_fallthru
      _
  $region6: #{f.1} parent=0 // loop_footer
    %s13 = sadd.s32 1, %s9
  $region7: #{f.1} parent=0 // loop_footer_branch
    %8 = sbr.rel target = $region3
  $region8: #{f.1} parent=0 // loop_exit
    _

</llo_original>
